<compile_context>
chip_gen: v5e
topology: v5e:2x2
jax: 0.10.0
libtpu: 0.0.40
codegen_flags: <defaults>
</compile_context>

<pallas_src>
import functools

import jax
import jax.numpy as jnp
from jax.experimental import pallas as pl
from jax.experimental.pallas import tpu as pltpu


def _round_up(x, m):
    return ((x + m - 1) // m) * m


def _m_pad(m):
    # Row padding for matmul LHS: tile at 128 for big M, round tiny M to 16.
    return _round_up(m, 128) if m >= 128 else _round_up(m, 16)


# ----------------------------------------------------------------------------
# Pallas kernels
# ----------------------------------------------------------------------------
def _mm_bias_kernel(x_ref, w_ref, b_ref, o_ref, *, relu):
    # bf16 (tm, K) @ bf16 (K, tn) on the MXU, f32 accumulate, f32 epilogue.
    acc = jnp.dot(x_ref[...], w_ref[...], preferred_element_type=jnp.float32)
    acc = acc + b_ref[...]
    if relu:
        acc = jnp.maximum(acc, 0.0)
    o_ref[...] = acc.astype(o_ref.dtype)


def _mm_bias_res_kernel(x_ref, w_ref, b_ref, r_ref, o_ref, *, relu):
    # Same as above, with the residual shortcut fused into the epilogue.
    acc = jnp.dot(x_ref[...], w_ref[...], preferred_element_type=jnp.float32)
    acc = acc + b_ref[...] + r_ref[...].astype(jnp.float32)
    if relu:
        acc = jnp.maximum(acc, 0.0)
    o_ref[...] = acc.astype(o_ref.dtype)


def _max_reduce_kernel(x_ref, o_ref):
    # x: (9, tm, C) stacked pooling windows -> elementwise max over axis 0.
    o_ref[...] = jnp.max(x_ref[...], axis=0)


def _avgpool_kernel(x_ref, o_ref, *, hw):
    # x: (HW, Np, C) -> mean over the leading spatial axis (f32 accumulate).
    s = jnp.sum(x_ref[...].astype(jnp.float32), axis=0)
    o_ref[...] = (s * (1.0 / float(hw))).astype(o_ref.dtype)


# ----------------------------------------------------------------------------
# Pallas wrappers
# ----------------------------------------------------------------------------
def _mm_padded(xp, wp, bp, rp=None, relu=False, out_dtype=jnp.bfloat16):
    """Padded matmul: (Mp, Kp) @ (Kp, Np) + bias [+ shortcut] [+ ReLU]."""
    Mp, Kp = xp.shape
    Kp2, Np = wp.shape
    assert Kp == Kp2 and bp.shape == (1, Np)
    tm = 128 if (Mp % 128 == 0 and Mp >= 128) else Mp
    tn = 128 if Np % 128 == 0 else Np
    grid = (Mp // tm, Np // tn)

    in_specs = [
        pl.BlockSpec((tm, Kp), lambda i, j: (i, 0)),   # x: resident across j
        pl.BlockSpec((Kp, tn), lambda i, j: (0, j)),   # w
        pl.BlockSpec((1, tn), lambda i, j: (0, j)),    # bias (f32)
    ]
    operands = [xp, wp, bp]
    if rp is None:
        kernel = functools.partial(_mm_bias_kernel, relu=relu)
    else:
        assert rp.shape == (Mp, Np)
        in_specs.append(pl.BlockSpec((tm, tn), lambda i, j: (i, j)))
        operands.append(rp)
        kernel = functools.partial(_mm_bias_res_kernel, relu=relu)

    return pl.pallas_call(
        kernel,
        out_shape=jax.ShapeDtypeStruct((Mp, Np), out_dtype),
        grid=grid,
        in_specs=in_specs,
        out_specs=pl.BlockSpec((tm, tn), lambda i, j: (i, j)),
        compiler_params=pltpu.CompilerParams(
            dimension_semantics=("parallel", "parallel"),
            vmem_limit_bytes=32 * 1024 * 1024,
        ),
    )(*operands)


def maxpool_3x3_s2_p1(x):
    """PyTorch MaxPool2d(kernel=3, stride=2, padding=1) on NHWC bf16 input."""
    n, h, w, c = x.shape
    oh = (h + 2 - 3) // 2 + 1
    ow = (w + 2 - 3) // 2 + 1
    xp = jnp.pad(x, ((0, 0), (1, 1), (1, 1), (0, 0)), constant_values=-1e30)
    wins = [xp[:, i:i + 2 * oh:2, j:j + 2 * ow:2, :]
            for i in range(3) for j in range(3)]
    stacked = jnp.stack(wins, axis=0).reshape(9, n * oh * ow, c)
    m = n * oh * ow
    mp = _round_up(m, 8)
    if mp > m:
        stacked = jnp.pad(stacked, ((0, 0), (0, mp - m), (0, 0)),
                          constant_values=-1e30)
    tm = 128 if mp % 128 == 0 else mp
    out = pl.pallas_call(
        _max_reduce_kernel,
        out_shape=jax.ShapeDtypeStruct((mp, c), x.dtype),
        grid=(mp // tm,),
        in_specs=[pl.BlockSpec((9, tm, c), lambda i: (0, i, 0))],
        out_specs=pl.BlockSpec((tm, c), lambda i: (i, 0)),
        compiler_params=pltpu.CompilerParams(
            dimension_semantics=("parallel",)),
    )(stacked)
    return out[:m, :c].reshape(n, oh, ow, c)


def global_avgpool(x):
    """AdaptiveAvgPool2d(1) + flatten on NHWC bf16 -> padded (Mp, C) bf16."""
    n, h, w, c = x.shape
    hw = h * w
    xt = jnp.transpose(x.reshape(n, hw, c), (1, 0, 2))  # (HW, N, C)
    npad = _m_pad(n)
    if npad > n:
        xt = jnp.pad(xt, ((0, 0), (0, npad - n), (0, 0)))
    return pl.pallas_call(
        functools.partial(_avgpool_kernel, hw=hw),
        out_shape=jax.ShapeDtypeStruct((npad, c), x.dtype),
        grid=(1,),
        in_specs=[pl.BlockSpec((hw, npad, c), lambda i: (0, 0, 0))],
        out_specs=pl.BlockSpec((npad, c), lambda i: (0, 0)),
    )(xt)


# ----------------------------------------------------------------------------
# Conv glue: im2col (bf16, K-padded in the concat) + Pallas matmul
# ----------------------------------------------------------------------------
def _im2col(x, kh, kw, stride, pad, k_target):
    if pad:
        x = jnp.pad(x, ((0, 0), (pad, pad), (pad, pad), (0, 0)))
    n, h, w, c = x.shape
    oh = (h - kh) // stride + 1
    ow = (w - kw) // stride + 1
    cols = [x[:, i:i + stride * oh:stride, j:j + stride * ow:stride, :]
            for i in range(kh) for j in range(kw)]
    k = kh * kw * c
    if k_target > k:  # fold K alignment padding into the single concat
        cols.append(jnp.zeros((n, oh, ow, k_target - k), x.dtype))
    patches = jnp.concatenate(cols, axis=-1).reshape(n * oh * ow, k_target)
    return patches, oh, ow


def conv_forward(x, cp, relu=False, shortcut=None):
    """x: NHWC bf16. Returns padded (Mp, Np) bf16 output and (n, oh, ow)."""
    kh, kw, stride, pad = cp["kh"], cp["kw"], cp["stride"], cp["pad"]
    Kp, _ = cp["w"].shape
    n = x.shape[0]
    patches, oh, ow = _im2col(x, kh, kw, stride, pad, Kp)
    m = n * oh * ow
    mp = _m_pad(m)
    if mp > m:
        patches = jnp.pad(patches, ((0, mp - m), (0, 0)))
    yp = _mm_padded(patches, cp["w"], cp["b"], rp=shortcut, relu=relu)
    return yp, (n, oh, ow)


def _crop_nhwc(yp, n, oh, ow, c):
    return yp[: n * oh * ow, :c].reshape(n, oh, ow, c)


def linear_forward(xp, lp, out_dtype=jnp.float32):
    """xp: padded (Mp, K') with zero columns beyond the real features."""
    Kp, _ = lp["w"].shape
    mp, kx = xp.shape
    xp = xp.astype(jnp.bfloat16)
    if kx < Kp:
        xp = jnp.pad(xp, ((0, 0), (0, Kp - kx)))
    return _mm_padded(xp, lp["w"], lp["b"], relu=False, out_dtype=out_dtype)


# ----------------------------------------------------------------------------
# Parameters: raw (PyTorch-like) init + one-time matmul-ready preparation
# ----------------------------------------------------------------------------
def bn_fold(gamma, beta, mean, var, eps=1e-5):
    scale = gamma * jax.lax.rsqrt(var + eps)
    return scale, beta - mean * scale


def init_params(key, feature_size=64, num_classes=10):
    kit = iter(jax.random.split(key, 256))

    def nxt():
        return next(kit)

    def conv(cout, cin, k):
        return jax.random.normal(nxt(), (cout, cin, k, k), jnp.float32) * 0.05

    def bn(c):
        return dict(
            gamma=1.0 + 0.1 * jax.random.normal(nxt(), (c,), jnp.float32),
            beta=0.1 * jax.random.normal(nxt(), (c,), jnp.float32),
            mean=0.1 * jax.random.normal(nxt(), (c,), jnp.float32),
            var=1.0 + 0.1 * jnp.abs(jax.random.normal(nxt(), (c,), jnp.float32)),
        )

    params = dict(conv1_w=conv(64, 3, 7), bn1=bn(64))
    in_planes = 64
    layers = []
    for planes, strides in [(64, (1, 1)), (128, (2, 1)),
                            (256, (2, 1)), (512, (2, 1))]:
        blocks = []
        for s in strides:
            blk = dict(
                stride=s,
                conv1_w=conv(planes, in_planes, 3), bn1=bn(planes),
                conv2_w=conv(planes, planes, 3), bn2=bn(planes),
            )
            if s != 1 or in_planes != planes:
                blk["down_w"] = conv(planes, in_planes, 1)
                blk["bn_down"] = bn(planes)
            blocks.append(blk)
            in_planes = planes
        layers.append(blocks)
    params["layers"] = layers
    params["emb_w"] = jax.random.normal(nxt(), (512, feature_size),
                                        jnp.float32) * 0.05
    params["emb_b"] = 0.01 * jax.random.normal(nxt(), (feature_size,),
                                               jnp.float32)
    params["fc_w"] = jax.random.normal(nxt(), (feature_size, num_classes),
                                       jnp.float32) * 0.05
    params["fc_b"] = 0.01 * jax.random.normal(nxt(), (num_classes,),
                                              jnp.float32)
    return params


def _prep_conv(w_oihw, bn, stride, pad):
    cout, cin, kh, kw = w_oihw.shape
    if bn is not None:
        scale, bias = bn_fold(**bn)
        w_oihw = w_oihw * scale[:, None, None, None]   # fold BN scale into W
    else:
        bias = jnp.zeros((cout,), jnp.float32)
    k = kh * kw * cin
    kp = _round_up(k, 128)
    np_ = _round_up(cout, 128)
    wm = jnp.transpose(w_oihw, (2, 3, 1, 0)).reshape(k, cout)   # (kh,kw,cin) order
    wm = jnp.pad(wm, ((0, kp - k), (0, np_ - cout))).astype(jnp.bfloat16)
    b = jnp.pad(bias, (0, np_ - cout)).reshape(1, np_).astype(jnp.float32)
    return dict(w=wm, b=b, kh=kh, kw=kw, stride=stride, pad=pad, cout=cout)


def _prep_linear(w_kn, b_n):
    k, n = w_kn.shape
    kp = _round_up(k, 128)
    np_ = _round_up(n, 128)
    wm = jnp.pad(w_kn, ((0, kp - k), (0, np_ - n))).astype(jnp.bfloat16)
    b = jnp.pad(b_n, (0, np_ - n)).reshape(1, np_).astype(jnp.float32)
    return dict(w=wm, b=b, nout=n)


def prepare_params(raw):
    prepped = dict(stem=_prep_conv(raw["conv1_w"], raw["bn1"], stride=2, pad=3))
    layers = []
    for blocks in raw["layers"]:
        pblocks = []
        for blk in blocks:
            pb = dict(
                conv1=_prep_conv(blk["conv1_w"], blk["bn1"],
                                 stride=blk["stride"], pad=1),
                conv2=_prep_conv(blk["conv2_w"], blk["bn2"], stride=1, pad=1),
            )
            if "down_w" in blk:
                pb["down"] = _prep_conv(blk["down_w"], blk["bn_down"],
                                        stride=blk["stride"], pad=0)
            pblocks.append(pb)
        layers.append(pblocks)
    prepped["layers"] = layers
    prepped["emb"] = _prep_linear(raw["emb_w"], raw["emb_b"])
    prepped["fc"] = _prep_linear(raw["fc_w"], raw["fc_b"])
    return prepped


# ----------------------------------------------------------------------------
# ResNet18 forward
# ----------------------------------------------------------------------------
def basic_block(x, blk):
    n, h, w, cin = x.shape
    # conv1 + BN + ReLU
    y1p, (n_, oh, ow) = conv_forward(x, blk["conv1"], relu=True)
    y1 = _crop_nhwc(y1p, n_, oh, ow, blk["conv1"]["cout"])
    # shortcut (padded (Mp, Np) matrix fed to the fused conv2 epilogue)
    m = n_ * oh * ow
    mp = _m_pad(m)
    np2 = blk["conv2"]["w"].shape[1]
    if "down" in blk:
        rp, _ = conv_forward(x, blk["down"], relu=False)   # already (mp, np2)
    else:
        rp = x.reshape(m, cin)
        if mp > m or np2 > cin:
            rp = jnp.pad(rp, ((0, mp - m), (0, np2 - cin)))
    # conv2 + BN, fused residual add + ReLU
    y2p, _ = conv_forward(y1, blk["conv2"], relu=True, shortcut=rp)
    return _crop_nhwc(y2p, n_, oh, ow, blk["conv2"]["cout"])


def forward(prepped, x_nchw, feat=False):
    # NCHW f32 -> NHWC bf16
    x = jnp.transpose(x_nchw, (0, 2, 3, 1)).astype(jnp.bfloat16)
    n = x.shape[0]
    # Stem: conv1(7x7, s2, p3) + frozen BN + ReLU, then maxpool(3x3, s2, p1)
    yp, (n_, oh, ow) = conv_forward(x, prepped["stem"], relu=True)
    x = _crop_nhwc(yp, n_, oh, ow, prepped["stem"]["cout"])
    x = maxpool_3x3_s2_p1(x)
    # layer1..layer4
    for blocks in prepped["layers"]:
        for blk in blocks:
            x = basic_block(x, blk)
    # global average pool + flatten (kept padded to feed the linear directly)
    pooled = global_avgpool(x)                       # (Mp, 512) bf16
    emb_p = linear_forward(pooled, prepped["emb"], out_dtype=jnp.float32)
    emb = emb_p[:n, : prepped["emb"]["nout"]]
    if feat:
        return emb
    out_p = linear_forward(emb_p, prepped["fc"], out_dtype=jnp.float32)
    out = out_p[:n, : prepped["fc"]["nout"]]
    return emb, out


if __name__ == "__main__":
    key = jax.random.PRNGKey(0)
    k_params, k_x = jax.random.split(key)
    raw_params = init_params(k_params, feature_size=64, num_classes=10)
    params = prepare_params(raw_params)   # one-time fold/pad/cast of all weights
    # Small ImageNet-like input: batch=2, 3 channels, 32x32 spatial (NCHW).
    x = jax.random.normal(k_x, (2, 3, 32, 32), jnp.float32)

    emb, out = forward(params, x)
    jax.block_until_ready(emb)
    jax.block_until_ready(out)

    assert emb.shape == (2, 64), emb.shape
    assert out.shape == (2, 10), out.shape
    assert bool(jnp.all(jnp.isfinite(emb))) and bool(jnp.all(jnp.isfinite(out)))
    print("KERNEL_OK")
</pallas_src>

<mosaic_0001>
module attributes {stable_mosaic.version = 11 : i64} {
  func.func @_mm_bias_kernel(%arg0: i32, %arg1: i32, %arg2: memref<128x256xbf16, #tpu.memory_space<vmem>>, %arg3: memref<256x128xbf16, #tpu.memory_space<vmem>>, %arg4: memref<1x128xf32, #tpu.memory_space<vmem>>, %arg5: memref<128x128xbf16, #tpu.memory_space<vmem>>) attributes {dimension_semantics = [#tpu.dimension_semantics<parallel>, #tpu.dimension_semantics<parallel>], iteration_bounds = array<i64: 4, 1>, scalar_prefetch = 0 : i64, scratch_operands = 0 : i64, tpu.core_type = #tpu.core_type<tc>, window_params = [{transform_indices = @transform_0, window_bounds = array<i64: 128, 256>}, {transform_indices = @transform_1, window_bounds = array<i64: 256, 128>}, {transform_indices = @transform_2, window_bounds = array<i64: 1, 128>}, {transform_indices = @transform_3, window_bounds = array<i64: 128, 128>}]} {
    %c0 = arith.constant 0 : index
    %c0_0 = arith.constant 0 : index
    %0 = vector.load %arg2[%c0, %c0_0] : memref<128x256xbf16, #tpu.memory_space<vmem>>, vector<128x256xbf16>
    %c0_1 = arith.constant 0 : index
    %c0_2 = arith.constant 0 : index
    %1 = vector.load %arg3[%c0_1, %c0_2] : memref<256x128xbf16, #tpu.memory_space<vmem>>, vector<256x128xbf16>
    %cst = arith.constant dense<0.000000e+00> : vector<128x128xf32>
    %2 = tpu.matmul %0, %1, %cst {dimension_numbers = #tpu.dot_dimension_numbers<[1], [0], [0], [1], [0, 0, 1, 1], [], []>} : vector<128x256xbf16>, vector<256x128xbf16>, vector<128x128xf32> -> vector<128x128xf32>
    %c0_3 = arith.constant 0 : index
    %c0_4 = arith.constant 0 : index
    %3 = vector.load %arg4[%c0_3, %c0_4] : memref<1x128xf32, #tpu.memory_space<vmem>>, vector<1x128xf32>
    %4 = vector.broadcast %3 : vector<1x128xf32> to vector<128x128xf32>
    %5 = arith.addf %2, %4 : vector<128x128xf32>
    %cst_5 = arith.constant 0.000000e+00 : f32
    %6 = vector.broadcast %cst_5 : f32 to vector<128x128xf32>
    %7 = arith.maximumf %5, %6 : vector<128x128xf32>
    %8 = arith.truncf %7 : vector<128x128xf32> to vector<128x128xbf16>
    %c0_6 = arith.constant 0 : index
    %c0_7 = arith.constant 0 : index
    %9 = vector.load %arg5[%c0_6, %c0_7] : memref<128x128xbf16, #tpu.memory_space<vmem>>, vector<128x128xbf16>
    tpu.vector_store %arg5[%c0_6, %c0_7], %8 {strides = array<i32>} : memref<128x128xbf16, #tpu.memory_space<vmem>>, vector<128x128xbf16>,
    return
  }
  func.func @transform_0(%arg0: i32, %arg1: i32) -> (i32, i32) {
    %c0_i32 = arith.constant 0 : i32
    %c0_i32_0 = arith.constant 0 : i32
    return %arg0, %c0_i32 : i32, i32
  }
  func.func @transform_1(%arg0: i32, %arg1: i32) -> (i32, i32) {
    %c0_i32 = arith.constant 0 : i32
    %c0_i32_0 = arith.constant 0 : i32
    return %c0_i32, %arg1 : i32, i32
  }
  func.func @transform_2(%arg0: i32, %arg1: i32) -> (i32, i32) {
    %c0_i32 = arith.constant 0 : i32
    %c0_i32_0 = arith.constant 0 : i32
    return %c0_i32, %arg1 : i32, i32
  }
  func.func @transform_3(%arg0: i32, %arg1: i32) -> (i32, i32) {
    %c0_i32 = arith.constant 0 : i32
    return %arg0, %arg1 : i32, i32
  }
}

</mosaic_0001>

<llo_original>
// kernel: tpu_custom_call.1
$region0: #{tpu_custom_call.1}
  #allocation0 [shape = 'u32[]', space=smem, size = 0x4, offset = 0x4, fixed_abs, tag = 'smem constant byte address 0x4 - core index']
  #allocation1 [shape = 'u32[72,128]{1,0:T(1,128)}', space=vmem, size = 0x9000, scoped, tag = 'internal scratch']
  %s0 = inlined_call_operand.hbm [shape: bf16[512,256], index: 0, kind: input, shape index: {}]
  %s1 = inlined_call_operand.hbm [shape: bf16[256,128], index: 1, kind: input, shape index: {}]
  %s2 = inlined_call_operand.vmem [shape: f32[1,128], index: 2, kind: input, shape index: {}]
  %s3 = inlined_call_operand.hbm [shape: bf16[512,128], index: 3, kind: output, shape index: {}]
  %s4 = sld [smem:[#allocation0]]
  $region53: #{tpu_custom_call.1} parent=0
    _
  %s6 = ssub.s32 1, %s4
  %s7 = scalar_select 0, %s6, %s4
  $region1: #{tpu_custom_call.1} parent=0
    #allocation2 [shape = 'u8[131072]{0}', space=vmem, size = 0x20000, scoped, tag = 'input window, operand 0']
    #allocation3 [shape = 's32[2]{0}', space=sflag, size = 0x8, scoped, tag = 'scoped memory for tpu_custom_call.1']
    #allocation4 [shape = 's32[2]{0}', space=sflag, size = 0x8, scoped, tag = 'scoped memory for tpu_custom_call.1']
    #allocation5 [shape = 'u8[65536]{0}', space=vmem, size = 0x10000, scoped, tag = 'input window, operand 1, single buffered']
    #allocation6 [shape = 's32[1]{0}', space=sflag, size = 0x4, scoped, tag = 'scoped memory for tpu_custom_call.1']
    #allocation7 [shape = 'u8[65536]{0}', space=vmem, size = 0x10000, scoped, tag = 'output window, operand 0']
    %8 = vsyncpa [#allocation3], 0
    %s9 = scalar_lea.sflag [#allocation3], 1
    %10 = vsyncpa %s9, 0
    %11 = vsyncpa [#allocation6], 0
    %12 = vsyncpa [#allocation4], 0
    %s13 = scalar_lea.sflag [#allocation4], 1
    %14 = vsyncpa %s13, 0
    loop: start=0, step=1, limit=6
    $region2: #{tpu_custom_call.1} parent=1 // loop_pre_header
      _
    $region3: #{tpu_custom_call.1} parent=1 // loop_header
      %s16 = sphi 0, %s20
      %p17 = scmp.ge.s32.totalorder %s16, 6
      %s23 = sphi 0, %s35
      %s24 = sphi 0, %s31
      %s25 = sphi 0, %s23
      %s26 = sphi 0, %s24
      %s27 = sphi 0, %s25
      %s28 = sphi 0, %s26
      %s38 = sphi 0, %s40
      %s41 = sphi 0, %s38
      %s42 = sphi 0, %s41
      %s58 = sphi 0, %s42
      %s64 = sphi 0, %s66
      %s67 = sphi 0, %s64
      %s68 = sphi 0, %s67
      %s84 = sphi 0, %s68
      %s90 = sphi 0, %s92
      %s93 = sphi 0, %s90
      %s94 = sphi 0, %s93
      %s110 = sphi 0, %s94
      %s118 = sphi 0, %s120
      %s121 = sphi 0, %s118
      %s122 = sphi 0, %s121
      %s138 = sphi 0, %s122
    $region4: #{tpu_custom_call.1} parent=1 // loop_header_branch
      %19 = sbr.rel (%p17) target = $region8
    $region5: #{tpu_custom_call.1} parent=1 // loop_body
      %s21 = ssub.s32 %s16, 1
      %s22 = ssub.s32 %s16, 2
      %s29 = sadd.s32 1, %s24
      %p30 = scmp.ge.s32.totalorder %s29, 1
      %s31 = scalar_select %p30, 0, %s29
      %s32 = sadd.s32 1, %s23
      %s33 = scalar_select %p30, %s32, %s23
      %p34 = scmp.ge.s32.totalorder %s33, 4
      %s35 = scalar_select %p34, 0, %s33
      %s36 = ssub.s32 %s23, %s35
      %p37 = scmp.eq.s32.totalorder %s36, 0
      %s39 = sadd.s32 %s38, 1
      %s40 = scalar_select %p37, %s38, %s39
      %p43 = pneg %p37
      %p44 = scmp.eq.s32.totalorder %s16, 3
      %p45 = por %p43, %p44
      %p46 = scmp.ne.s32.totalorder %s38, %s41
      %p47 = scmp.eq.s32.totalorder %s16, 0
      %p48 = por %p46, %p47
      %p49 = scmp.ne.s32.totalorder %s38, %s41
      %p50 = scmp.eq.s32.totalorder %s21, 3
      %p51 = por %p49, %p50
      %p52 = scmp.ne.s32.totalorder %s41, %s42
      %p53 = scmp.eq.s32.totalorder %s21, 0
      %p54 = por %p52, %p53
      %p55 = scmp.ne.s32.totalorder %s41, %s42
      %p56 = scmp.eq.s32.totalorder %s22, 3
      %p57 = por %p55, %p56
      %p59 = scmp.ne.s32.totalorder %s42, %s58
      %p60 = scmp.eq.s32.totalorder %s22, 0
      %p61 = por %p59, %p60
      %s62 = ssub.s32 %s24, %s31
      %p63 = scmp.eq.s32.totalorder %s62, 0
      %s65 = sadd.s32 %s64, 1
      %s66 = scalar_select %p63, %s64, %s65
      %p69 = pneg %p63
      %p70 = scmp.eq.s32.totalorder %s16, 3
      %p71 = por %p69, %p70
      %p72 = scmp.ne.s32.totalorder %s64, %s67
      %p73 = scmp.eq.s32.totalorder %s16, 0
      %p74 = por %p72, %p73
      %p75 = scmp.ne.s32.totalorder %s64, %s67
      %p76 = scmp.eq.s32.totalorder %s21, 3
      %p77 = por %p75, %p76
      %p78 = scmp.ne.s32.totalorder %s67, %s68
      %p79 = scmp.eq.s32.totalorder %s21, 0
      %p80 = por %p78, %p79
      %p81 = scmp.ne.s32.totalorder %s67, %s68
      %p82 = scmp.eq.s32.totalorder %s22, 3
      %p83 = por %p81, %p82
      %p85 = scmp.ne.s32.totalorder %s68, %s84
      %p86 = scmp.eq.s32.totalorder %s22, 0
      %p87 = por %p85, %p86
      %s88 = ssub.s32 %s24, %s31
      %p89 = scmp.eq.s32.totalorder %s88, 0
      %s91 = sadd.s32 %s90, 1
      %s92 = scalar_select %p89, %s90, %s91
      %p95 = pneg %p89
      %p96 = scmp.eq.s32.totalorder %s16, 3
      %p97 = por %p95, %p96
      %p98 = scmp.ne.s32.totalorder %s90, %s93
      %p99 = scmp.eq.s32.totalorder %s16, 0
      %p100 = por %p98, %p99
      %p101 = scmp.ne.s32.totalorder %s90, %s93
      %p102 = scmp.eq.s32.totalorder %s21, 3
      %p103 = por %p101, %p102
      %p104 = scmp.ne.s32.totalorder %s93, %s94
      %p105 = scmp.eq.s32.totalorder %s21, 0
      %p106 = por %p104, %p105
      %p107 = scmp.ne.s32.totalorder %s93, %s94
      %p108 = scmp.eq.s32.totalorder %s22, 3
      %p109 = por %p107, %p108
      %p111 = scmp.ne.s32.totalorder %s94, %s110
      %p112 = scmp.eq.s32.totalorder %s22, 0
      %p113 = por %p111, %p112
      %s114 = ssub.s32 %s23, %s35
      %s115 = ssub.s32 %s24, %s31
      %s116 = sor.u32 %s114, %s115
      %p117 = scmp.eq.s32.totalorder %s116, 0
      %s119 = sadd.s32 %s118, 1
      %s120 = scalar_select %p117, %s118, %s119
      %p123 = pneg %p117
      %p124 = scmp.eq.s32.totalorder %s16, 3
      %p125 = por %p123, %p124
      %p126 = scmp.ne.s32.totalorder %s118, %s121
      %p127 = scmp.eq.s32.totalorder %s16, 0
      %p128 = por %p126, %p127
      %p129 = scmp.ne.s32.totalorder %s118, %s121
      %p130 = scmp.eq.s32.totalorder %s21, 3
      %p131 = por %p129, %p130
      %p132 = scmp.ne.s32.totalorder %s121, %s122
      %p133 = scmp.eq.s32.totalorder %s21, 0
      %p134 = por %p132, %p133
      %p135 = scmp.ne.s32.totalorder %s121, %s122
      %p136 = scmp.eq.s32.totalorder %s22, 3
      %p137 = por %p135, %p136
      %p139 = scmp.ne.s32.totalorder %s122, %s138
      %p140 = scmp.eq.s32.totalorder %s22, 0
      %p141 = por %p139, %p140
      %p142 = scmp.le.s32.totalorder 1, %s16
      %p143 = scmp.lt.s32.totalorder %s16, 5
      %p144 = pnand %p142, %p143
      %p145 = pneg %p144
      // Predicated region
      $region9: #{tpu_custom_call.1} parent=5 // pred_check
        _
      $region10: #{tpu_custom_call.1} parent=5 // pred_check_branch
        %147 = sbr.rel (%p144) target = $region12
      $region11: #{tpu_custom_call.1} parent=5 // pred_region
        %s148 = ssub.s32 %s16, 1
        // Predicated region
        $region13: #{tpu_custom_call.1} parent=11 // pred_check
          %p149 = pneg %p80
        $region14: #{tpu_custom_call.1} parent=11 // pred_check_branch
          %151 = sbr.rel (%p149) target = $region16
        $region15: #{tpu_custom_call.1} parent=11 // pred_region
          %153 = vsyncadd [#allocation6], 0
          %s154 = smul.addr %s26, 4
          %s155 = scalar_lea.hbm %s1, %s154
          %s156 = sshll.u32 %s155, 4
          %s157 = int_to_ptr.hbm [resolvable:$true] %s156
          %s158 = sshll.u32 [#allocation5], 4
          %s159 = int_to_ptr.vmem [resolvable:$true] %s158
          %164 = dma.hbm_to_vmem [thread:$0]  %s157, 2048, %s159, [#allocation6], 64, 64, 4
        $region16: #{tpu_custom_call.1} parent=11 // pred_fallthru
          _
        // Predicated region
        $region17: #{tpu_custom_call.1} parent=11 // pred_check
          %p165 = pneg %p106
        $region18: #{tpu_custom_call.1} parent=11 // pred_check_branch
          %167 = sbr.rel (%p165) target = $region20
        $region19: #{tpu_custom_call.1} parent=11 // pred_region
          %p168 = scmp.lt.s32.totalorder %s26, 0
          %s169 = scalar_select %p168, %s26, 0
          %s170 = scalar_lea.vmem %s2, %s169
        $region20: #{tpu_custom_call.1} parent=11 // pred_fallthru
          _
      $region12: #{tpu_custom_call.1} parent=5 // pred_fallthru
        _
      %p171 = scmp.lt.s32.totalorder %s16, 4
      // Predicated region
      $region21: #{tpu_custom_call.1} parent=5 // pred_check
        %p172 = pneg %p171
      $region22: #{tpu_custom_call.1} parent=5 // pred_check_branch
        %174 = sbr.rel (%p172) target = $region24
      $region23: #{tpu_custom_call.1} parent=5 // pred_region
        // Predicated region
        $region25: #{tpu_custom_call.1} parent=23 // pred_check
          %p175 = pneg %p48
        $region26: #{tpu_custom_call.1} parent=23 // pred_check_branch
          %177 = sbr.rel (%p175) target = $region28
        $region27: #{tpu_custom_call.1} parent=23 // pred_region
          %s178 = sand.u32 %s38, 1
          %s179 = scalar_lea.sflag [#allocation3], %s178
          %s180 = sand.u32 %s38, 1
          %s181 = smul.addr %s180, 128
          %s182 = scalar_lea.vmem [#allocation2], %s181
          %s183 = smul.u32 16, %s23
          %185 = vsyncadd %s179, 0
          %s186 = smul.addr %s183, 2
          %s187 = smul.addr %s186, 4
          %s188 = scalar_lea.hbm %s0, %s187
          %s189 = sshll.u32 %s188, 4
          %s190 = int_to_ptr.hbm [resolvable:$true] %s189
          %s191 = sshll.u32 %s182, 4
          %s192 = int_to_ptr.vmem [resolvable:$true] %s191
          %197 = dma.hbm_to_vmem [thread:$0]  %s190, 2048, %s192, %s179, 128, 128, 8
        $region28: #{tpu_custom_call.1} parent=23 // pred_fallthru
          _
      $region24: #{tpu_custom_call.1} parent=5 // pred_fallthru
        _
      %p198 = scmp.le.s32.totalorder 1, %s16
      %p199 = scmp.lt.s32.totalorder %s16, 5
      %p200 = pnand %p198, %p199
      %p201 = pneg %p200
      // Predicated region
      $region29: #{tpu_custom_call.1} parent=5 // pred_check
        _
      $region30: #{tpu_custom_call.1} parent=5 // pred_check_branch
        %203 = sbr.rel (%p200) target = $region32
      $region31: #{tpu_custom_call.1} parent=5 // pred_region
        %s204 = ssub.s32 %s16, 1
        %s205 = sand.u32 %s41, 1
        %s206 = scalar_lea.sflag [#allocation3], %s205
        %s207 = sand.u32 %s41, 1
        %s208 = smul.addr %s207, 128
        %s209 = scalar_lea.vmem [#allocation2], %s208
        // Predicated region
        $region33: #{tpu_custom_call.1} parent=31 // pred_check
          %p210 = pneg %p54
        $region34: #{tpu_custom_call.1} parent=31 // pred_check_branch
          %212 = sbr.rel (%p210) target = $region36
        $region35: #{tpu_custom_call.1} parent=31 // pred_region
          %214 = dma.done %s206, 2048
        $region36: #{tpu_custom_call.1} parent=31 // pred_fallthru
          _
        // Predicated region
        $region37: #{tpu_custom_call.1} parent=31 // pred_check
          %p215 = pneg %p80
        $region38: #{tpu_custom_call.1} parent=31 // pred_check_branch
          %217 = sbr.rel (%p215) target = $region40
        $region39: #{tpu_custom_call.1} parent=31 // pred_region
          %219 = dma.done [#allocation6], 2048
        $region40: #{tpu_custom_call.1} parent=31 // pred_fallthru
          _
        %s220 = sand.u32 %s41, 1
        %s221 = scalar_lea.sflag [#allocation3], %s220
        %s222 = sand.u32 %s41, 1
        %s223 = smul.addr %s222, 128
        %s224 = scalar_lea.vmem [#allocation2], %s223
        %p225 = pneg %p54
        %p226 = pneg %p51
        %p227 = pneg %p80
        %p228 = pneg %p77
        %p229 = scmp.lt.s32.totalorder %s26, 0
        %s230 = scalar_select %p229, %s26, 0
        %s231 = scalar_lea.vmem %s2, %s230
        %p232 = pneg %p106
        %p233 = pneg %p103
        %p234 = pneg %p134
        %p235 = pneg %p131
        %s236 = sand.u32 %s121, 1
        %s237 = scalar_lea.sflag [#allocation4], %s236
        %s238 = sand.u32 %s121, 1
        %s239 = smul.addr %s238, 64
        %s240 = scalar_lea.vmem [#allocation7], %s239
        %s241 = smul.u32 16, %s25
        %p242 = scmp.lt.s32.totalorder %s26, 0
        %s243 = scalar_select %p242, %s26, 0
        %s244 = scalar_lea.vmem %s2, %s243
        %s245 = smul.u32 16, %s25
        %v246 = vld [vmem:[%s209] sm:$0xff]
        %v247 = vld [vmem:[%s209 + $0x8] sm:$0xff]
        %v248 = vld [vmem:[%s209 + $0x10] sm:$0xff]
        %v249 = vld [vmem:[%s209 + $0x18] sm:$0xff]
        %v250 = vld [vmem:[%s209 + $0x20] sm:$0xff]
        %v251 = vld [vmem:[%s209 + $0x28] sm:$0xff]
        %v252 = vld [vmem:[%s209 + $0x30] sm:$0xff]
        %v253 = vld [vmem:[%s209 + $0x38] sm:$0xff]
        %v254 = vld [vmem:[%s209 + $0x40] sm:$0xff]
        %v255 = vld [vmem:[%s209 + $0x48] sm:$0xff]
        %v256 = vld [vmem:[%s209 + $0x50] sm:$0xff]
        %v257 = vld [vmem:[%s209 + $0x58] sm:$0xff]
        %v258 = vld [vmem:[%s209 + $0x60] sm:$0xff]
        %v259 = vld [vmem:[%s209 + $0x68] sm:$0xff]
        %v260 = vld [vmem:[%s209 + $0x70] sm:$0xff]
        %v261 = vld [vmem:[%s209 + $0x78] sm:$0xff]
        %v262 = vld [vmem:[#allocation5] sm:$0xf]
        %v263 = vld [vmem:[#allocation5 + $0x4] sm:$0xf]
        %v264 = vld [vmem:[#allocation5 + $0x8] sm:$0xf]
        %v265 = vld [vmem:[#allocation5 + $0xc] sm:$0xf]
        %v266 = vld [vmem:[#allocation5 + $0x10] sm:$0xf]
        %v267 = vld [vmem:[#allocation5 + $0x14] sm:$0xf]
        %v268 = vld [vmem:[#allocation5 + $0x18] sm:$0xf]
        %v269 = vld [vmem:[#allocation5 + $0x1c] sm:$0xf]
        %v270 = vld [vmem:[#allocation5 + $0x20] sm:$0xf]
        %v271 = vld [vmem:[#allocation5 + $0x24] sm:$0xf]
        %v272 = vld [vmem:[#allocation5 + $0x28] sm:$0xf]
        %v273 = vld [vmem:[#allocation5 + $0x2c] sm:$0xf]
        %v274 = vld [vmem:[#allocation5 + $0x30] sm:$0xf]
        %v275 = vld [vmem:[#allocation5 + $0x34] sm:$0xf]
        %v276 = vld [vmem:[#allocation5 + $0x38] sm:$0xf]
        %v277 = vld [vmem:[#allocation5 + $0x3c] sm:$0xf]
        %v278 = vld [vmem:[#allocation5 + $0x40] sm:$0xf]
        %v279 = vld [vmem:[#allocation5 + $0x44] sm:$0xf]
        %v280 = vld [vmem:[#allocation5 + $0x48] sm:$0xf]
        %v281 = vld [vmem:[#allocation5 + $0x4c] sm:$0xf]
        %v282 = vld [vmem:[#allocation5 + $0x50] sm:$0xf]
        %v283 = vld [vmem:[#allocation5 + $0x54] sm:$0xf]
        %v284 = vld [vmem:[#allocation5 + $0x58] sm:$0xf]
        %v285 = vld [vmem:[#allocation5 + $0x5c] sm:$0xf]
        %v286 = vld [vmem:[#allocation5 + $0x60] sm:$0xf]
        %v287 = vld [vmem:[#allocation5 + $0x64] sm:$0xf]
        %v288 = vld [vmem:[#allocation5 + $0x68] sm:$0xf]
        %v289 = vld [vmem:[#allocation5 + $0x6c] sm:$0xf]
        %v290 = vld [vmem:[#allocation5 + $0x70] sm:$0xf]
        %v291 = vld [vmem:[#allocation5 + $0x74] sm:$0xf]
        %v292 = vld [vmem:[#allocation5 + $0x78] sm:$0xf]
        %v293 = vld [vmem:[#allocation5 + $0x7c] sm:$0xf]
        %v294 = vld [vmem:[%s244] sm:$0x1]
        %v296 = vperm.slane %v294, 0
        %v314 = vunpack.c.l.b16 %v246
        %v315 = vunpack.c.h.b16 %v246
        %v316 = vunpack.c.l.b16 %v247
        %v317 = vunpack.c.h.b16 %v247
        %v318 = vunpack.c.l.b16 %v248
        %v319 = vunpack.c.h.b16 %v248
        %v320 = vunpack.c.l.b16 %v249
        %v321 = vunpack.c.h.b16 %v249
        %v322 = vunpack.c.l.b16 %v250
        %v323 = vunpack.c.h.b16 %v250
        %v324 = vunpack.c.l.b16 %v251
        %v325 = vunpack.c.h.b16 %v251
        %v326 = vunpack.c.l.b16 %v252
        %v327 = vunpack.c.h.b16 %v252
        %v328 = vunpack.c.l.b16 %v253
        %v329 = vunpack.c.h.b16 %v253
        %v330 = vunpack.c.l.b16 %v254
        %v331 = vunpack.c.h.b16 %v254
        %v332 = vunpack.c.l.b16 %v255
        %v333 = vunpack.c.h.b16 %v255
        %v334 = vunpack.c.l.b16 %v256
        %v335 = vunpack.c.h.b16 %v256
        %v336 = vunpack.c.l.b16 %v257
        %v337 = vunpack.c.h.b16 %v257
        %v338 = vunpack.c.l.b16 %v258
        %v339 = vunpack.c.h.b16 %v258
        %v340 = vunpack.c.l.b16 %v259
        %v341 = vunpack.c.h.b16 %v259
        %v342 = vunpack.c.l.b16 %v260
        %v343 = vunpack.c.h.b16 %v260
        %v344 = vunpack.c.l.b16 %v261
        %v345 = vunpack.c.h.b16 %v261
        %v346 = vpack.c.b16 %v316, %v314
        %v347 = vpack.c.b16 %v317, %v315
        %v348 = vpack.c.b16 %v320, %v318
        %v349 = vpack.c.b16 %v321, %v319
        %v350 = vpack.c.b16 %v324, %v322
        %v351 = vpack.c.b16 %v325, %v323
        %v352 = vpack.c.b16 %v328, %v326
        %v353 = vpack.c.b16 %v329, %v327
        %v354 = vpack.c.b16 %v332, %v330
        %v355 = vpack.c.b16 %v333, %v331
        %v356 = vpack.c.b16 %v336, %v334
        %v357 = vpack.c.b16 %v337, %v335
        %v358 = vpack.c.b16 %v340, %v338
        %v359 = vpack.c.b16 %v341, %v339
        %v360 = vpack.c.b16 %v344, %v342
        %v361 = vpack.c.b16 %v345, %v343
        %v410 = vunpack.c.l.b16 %v262
        %v411 = vunpack.c.l.b16 %v263
        %v412 = vunpack.c.l.b16 %v264
        %v413 = vunpack.c.l.b16 %v265
        %v414 = vunpack.c.l.b16 %v266
        %v415 = vunpack.c.l.b16 %v267
        %v416 = vunpack.c.l.b16 %v268
        %v417 = vunpack.c.l.b16 %v269
        %v418 = vunpack.c.l.b16 %v270
        %v419 = vunpack.c.l.b16 %v271
        %v420 = vunpack.c.l.b16 %v272
        %v421 = vunpack.c.l.b16 %v273
        %v422 = vunpack.c.l.b16 %v274
        %v423 = vunpack.c.l.b16 %v275
        %v424 = vunpack.c.l.b16 %v276
        %v425 = vunpack.c.l.b16 %v277
        %v426 = vunpack.c.l.b16 %v278
        %v427 = vunpack.c.l.b16 %v279
        %v428 = vunpack.c.l.b16 %v280
        %v429 = vunpack.c.l.b16 %v281
        %v430 = vunpack.c.l.b16 %v282
        %v431 = vunpack.c.l.b16 %v283
        %v432 = vunpack.c.l.b16 %v284
        %v433 = vunpack.c.l.b16 %v285
        %v434 = vunpack.c.l.b16 %v286
        %v435 = vunpack.c.l.b16 %v287
        %v436 = vunpack.c.l.b16 %v288
        %v437 = vunpack.c.l.b16 %v289
        %v438 = vunpack.c.l.b16 %v290
        %v439 = vunpack.c.l.b16 %v291
        %v440 = vunpack.c.l.b16 %v292
        %v441 = vunpack.c.l.b16 %v293
        %v442 = vpack.c.b16 %v411, %v410
        %v443 = vpack.c.b16 %v413, %v412
        %v444 = vpack.c.b16 %v415, %v414
        %v445 = vpack.c.b16 %v417, %v416
        %v446 = vpack.c.b16 %v419, %v418
        %v447 = vpack.c.b16 %v421, %v420
        %v448 = vpack.c.b16 %v423, %v422
        %v449 = vpack.c.b16 %v425, %v424
        %v450 = vpack.c.b16 %v427, %v426
        %v451 = vpack.c.b16 %v429, %v428
        %v452 = vpack.c.b16 %v431, %v430
        %v453 = vpack.c.b16 %v433, %v432
        %v454 = vpack.c.b16 %v435, %v434
        %v455 = vpack.c.b16 %v437, %v436
        %v456 = vpack.c.b16 %v439, %v438
        %v457 = vpack.c.b16 %v441, %v440
        %474 = vmatpush.bf16.msra.mxu0 %v449
        %475 = vmatpush.bf16.msra.mxu0 %v448
        %476 = vmatpush.bf16.msra.mxu0 %v447
        %477 = vmatpush.bf16.msra.mxu0 %v446
        %478 = vmatpush.bf16.msra.mxu0 %v445
        %479 = vmatpush.bf16.msra.mxu0 %v444
        %480 = vmatpush.bf16.msra.mxu0 %v443
        %481 = vmatpush.bf16.msra.mxu0 %v442
        %482 = vmatmul.bf16.gmra.mxu0 %v346
        %v483 = vpop.f32.mrf.mxu0
        %v484 = vadd.f32 %v296, %v483
        %v485 = vpop.f32.mrf.mxu0
        %v486 = vadd.f32 %v296, %v485
        %487 = vmatmul.bf16.gmra.mxu0 %v348
        %v488 = vpop.f32.mrf.mxu0
        %v489 = vadd.f32 %v296, %v488
        %v490 = vpop.f32.mrf.mxu0
        %v491 = vadd.f32 %v296, %v490
        %492 = vmatmul.bf16.gmra.mxu0 %v350
        %v493 = vpop.f32.mrf.mxu0
        %v494 = vadd.f32 %v296, %v493
        %v495 = vpop.f32.mrf.mxu0
        %v496 = vadd.f32 %v296, %v495
        %497 = vmatmul.bf16.gmra.mxu0 %v352
        %v498 = vpop.f32.mrf.mxu0
        %v499 = vadd.f32 %v296, %v498
        %v500 = vpop.f32.mrf.mxu0
        %v501 = vadd.f32 %v296, %v500
        %502 = vmatmul.bf16.gmra.mxu0 %v354
        %v503 = vpop.f32.mrf.mxu0
        %v504 = vadd.f32 %v296, %v503
        %v505 = vpop.f32.mrf.mxu0
        %v506 = vadd.f32 %v296, %v505
        %507 = vmatmul.bf16.gmra.mxu0 %v356
        %v508 = vpop.f32.mrf.mxu0
        %v509 = vadd.f32 %v296, %v508
        %v510 = vpop.f32.mrf.mxu0
        %v511 = vadd.f32 %v296, %v510
        %512 = vmatmul.bf16.gmra.mxu0 %v358
        %v513 = vpop.f32.mrf.mxu0
        %v514 = vadd.f32 %v296, %v513
        %v515 = vpop.f32.mrf.mxu0
        %v516 = vadd.f32 %v296, %v515
        %517 = vmatmul.bf16.gmra.mxu0 %v360
        %v518 = vpop.f32.mrf.mxu0
        %v519 = vadd.f32 %v296, %v518
        %v520 = vpop.f32.mrf.mxu0
        %v521 = vadd.f32 %v296, %v520
        %522 = vdwg.mxu0
        %523 = vmatpush.bf16.msra.mxu0 %v457
        %524 = vmatpush.bf16.msra.mxu0 %v456
        %525 = vmatpush.bf16.msra.mxu0 %v455
        %526 = vmatpush.bf16.msra.mxu0 %v454
        %527 = vmatpush.bf16.msra.mxu0 %v453
        %528 = vmatpush.bf16.msra.mxu0 %v452
        %529 = vmatpush.bf16.msra.mxu0 %v451
        %530 = vmatpush.bf16.msra.mxu0 %v450
        %531 = vmatmul.bf16.gmra.mxu0 %v347
        %v532 = vpop.f32.mrf.mxu0
        %v533 = vadd.f32 %v484, %v532
        %v534 = vpop.f32.mrf.mxu0
        %v535 = vadd.f32 %v486, %v534
        %536 = vmatmul.bf16.gmra.mxu0 %v349
        %v537 = vpop.f32.mrf.mxu0
        %v538 = vadd.f32 %v489, %v537
        %v539 = vpop.f32.mrf.mxu0
        %v540 = vadd.f32 %v491, %v539
        %541 = vmatmul.bf16.gmra.mxu0 %v351
        %v542 = vpop.f32.mrf.mxu0
        %v543 = vadd.f32 %v494, %v542
        %v544 = vpop.f32.mrf.mxu0
        %v545 = vadd.f32 %v496, %v544
        %546 = vmatmul.bf16.gmra.mxu0 %v353
        %v547 = vpop.f32.mrf.mxu0
        %v548 = vadd.f32 %v499, %v547
        %v549 = vpop.f32.mrf.mxu0
        %v550 = vadd.f32 %v501, %v549
        %551 = vmatmul.bf16.gmra.mxu0 %v355
        %v552 = vpop.f32.mrf.mxu0
        %v553 = vadd.f32 %v504, %v552
        %v554 = vpop.f32.mrf.mxu0
        %v555 = vadd.f32 %v506, %v554
        %556 = vmatmul.bf16.gmra.mxu0 %v357
        %v557 = vpop.f32.mrf.mxu0
        %v558 = vadd.f32 %v509, %v557
        %v559 = vpop.f32.mrf.mxu0
        %v560 = vadd.f32 %v511, %v559
        %561 = vmatmul.bf16.gmra.mxu0 %v359
        %v562 = vpop.f32.mrf.mxu0
        %v563 = vadd.f32 %v514, %v562
        %v564 = vpop.f32.mrf.mxu0
        %v565 = vadd.f32 %v516, %v564
        %566 = vmatmul.bf16.gmra.mxu0 %v361
        %v567 = vpop.f32.mrf.mxu0
        %v568 = vadd.f32 %v519, %v567
        %v569 = vpop.f32.mrf.mxu0
        %v570 = vadd.f32 %v521, %v569
        %571 = vdwg.mxu0
        %v572 = vmax.f32 %v533, 0.0
        %v573 = vmax.f32 %v535, 0.0
        %v574 = vmax.f32 %v538, 0.0
        %v575 = vmax.f32 %v540, 0.0
        %v576 = vmax.f32 %v543, 0.0
        %v577 = vmax.f32 %v545, 0.0
        %v578 = vmax.f32 %v548, 0.0
        %v579 = vmax.f32 %v550, 0.0
        %v580 = vmax.f32 %v553, 0.0
        %v581 = vmax.f32 %v555, 0.0
        %v582 = vmax.f32 %v558, 0.0
        %v583 = vmax.f32 %v560, 0.0
        %v584 = vmax.f32 %v563, 0.0
        %v585 = vmax.f32 %v565, 0.0
        %v586 = vmax.f32 %v568, 0.0
        %v587 = vmax.f32 %v570, 0.0
        %v588 = vpack.c.bf16 %v572, %v572
        %v589 = vpack.c.bf16 %v573, %v573
        %v590 = vpack.c.bf16 %v574, %v574
        %v591 = vpack.c.bf16 %v575, %v575
        %v592 = vpack.c.bf16 %v576, %v576
        %v593 = vpack.c.bf16 %v577, %v577
        %v594 = vpack.c.bf16 %v578, %v578
        %v595 = vpack.c.bf16 %v579, %v579
        %v596 = vpack.c.bf16 %v580, %v580
        %v597 = vpack.c.bf16 %v581, %v581
        %v598 = vpack.c.bf16 %v582, %v582
        %v599 = vpack.c.bf16 %v583, %v583
        %v600 = vpack.c.bf16 %v584, %v584
        %v601 = vpack.c.bf16 %v585, %v585
        %v602 = vpack.c.bf16 %v586, %v586
        %v603 = vpack.c.bf16 %v587, %v587
        %604 = vst [vmem:[%s240] sm:$0xf] %v588
        %605 = vst [vmem:[%s240 + $0x4] sm:$0xf] %v589
        %606 = vst [vmem:[%s240 + $0x8] sm:$0xf] %v590
        %607 = vst [vmem:[%s240 + $0xc] sm:$0xf] %v591
        %608 = vst [vmem:[%s240 + $0x10] sm:$0xf] %v592
        %609 = vst [vmem:[%s240 + $0x14] sm:$0xf] %v593
        %610 = vst [vmem:[%s240 + $0x18] sm:$0xf] %v594
        %611 = vst [vmem:[%s240 + $0x1c] sm:$0xf] %v595
        %612 = vst [vmem:[%s240 + $0x20] sm:$0xf] %v596
        %613 = vst [vmem:[%s240 + $0x24] sm:$0xf] %v597
        %614 = vst [vmem:[%s240 + $0x28] sm:$0xf] %v598
        %615 = vst [vmem:[%s240 + $0x2c] sm:$0xf] %v599
        %616 = vst [vmem:[%s240 + $0x30] sm:$0xf] %v600
        %617 = vst [vmem:[%s240 + $0x34] sm:$0xf] %v601
        %618 = vst [vmem:[%s240 + $0x38] sm:$0xf] %v602
        %619 = vst [vmem:[%s240 + $0x3c] sm:$0xf] %v603
        %s620 = sand.u32 %s121, 1
        %s621 = scalar_lea.sflag [#allocation4], %s620
        %s622 = sand.u32 %s121, 1
        %s623 = smul.addr %s622, 64
        %s624 = scalar_lea.vmem [#allocation7], %s623
        // Predicated region
        $region41: #{tpu_custom_call.1} parent=31 // pred_check
          %p625 = pneg %p131
        $region42: #{tpu_custom_call.1} parent=31 // pred_check_branch
          %627 = sbr.rel (%p625) target = $region44
        $region43: #{tpu_custom_call.1} parent=31 // pred_region
          %s628 = smul.u32 16, %s25
          %630 = vsyncadd %s621, 0
          %s631 = sadd.s32 %s26, %s628
          %s632 = smul.addr %s631, 4
          %s633 = scalar_lea.hbm %s3, %s632
          %s634 = sshll.u32 %s624, 4
          %s635 = int_to_ptr.vmem [resolvable:$true] %s634
          %s636 = sshll.u32 %s633, 4
          %s637 = int_to_ptr.hbm [resolvable:$true] %s636
          %642 = dma.vmem_to_hbm [thread:$0]  %s635, 1024, %s637, %s621, 64, 64, 4
        $region44: #{tpu_custom_call.1} parent=31 // pred_fallthru
          _
      $region32: #{tpu_custom_call.1} parent=5 // pred_fallthru
        _
      %p643 = scmp.le.s32.totalorder 2, %s16
      // Predicated region
      $region45: #{tpu_custom_call.1} parent=5 // pred_check
        %p644 = pneg %p643
      $region46: #{tpu_custom_call.1} parent=5 // pred_check_branch
        %646 = sbr.rel (%p644) target = $region48
      $region47: #{tpu_custom_call.1} parent=5 // pred_region
        %s647 = ssub.s32 %s16, 2
        // Predicated region
        $region49: #{tpu_custom_call.1} parent=47 // pred_check
          %p648 = pneg %p137
        $region50: #{tpu_custom_call.1} parent=47 // pred_check_branch
          %650 = sbr.rel (%p648) target = $region52
        $region51: #{tpu_custom_call.1} parent=47 // pred_region
          %s651 = sand.u32 %s122, 1
          %s652 = scalar_lea.sflag [#allocation4], %s651
          %s653 = sand.u32 %s122, 1
          %s654 = smul.addr %s653, 64
          %s655 = scalar_lea.vmem [#allocation7], %s654
          %657 = dma.done %s652, 1024
        $region52: #{tpu_custom_call.1} parent=47 // pred_fallthru
          _
      $region48: #{tpu_custom_call.1} parent=5 // pred_fallthru
        _
    $region6: #{tpu_custom_call.1} parent=1 // loop_footer
      %s20 = sadd.s32 1, %s16
    $region7: #{tpu_custom_call.1} parent=1 // loop_footer_branch
      %15 = sbr.rel target = $region3
    $region8: #{tpu_custom_call.1} parent=1 // loop_exit
      _
    %658 = vsyncpa [#allocation3], 1
    %s659 = scalar_lea.sflag [#allocation3], 1
    %660 = vsyncpa %s659, 1
    %661 = vsyncpa [#allocation6], 1
    %662 = vsyncpa [#allocation4], 1
    %s663 = scalar_lea.sflag [#allocation4], 1
    %664 = vsyncpa %s663, 1

</llo_original>
